<compile_context>
chip_gen: v6e
topology: v6e:2x2x1
jax: 0.10.0
libtpu: 0.0.40
codegen_flags: <defaults>
</compile_context>

<pallas_src>
import jax
import jax.numpy as jnp
from jax.experimental import pallas as pl
from jax.experimental.pallas import tpu as pltpu

_LANE_COLS = 2048                    # preferred lane-dense last dim (multiple of 128)
_BUF_BYTES = 8 * 1024 * 1024         # per-buffer VMEM byte budget (dtype-aware rows)
_VMEM_LIMIT = 40 * 1024 * 1024       # 2*(in+out) double-buffered 8 MiB tiles + headroom
_SPLIT_MIN_BYTES = 1 * 1024 * 1024   # only force a >=2-step grid above this size


def _round_up(n: int, m: int) -> int:
    return ((n + m - 1) // m) * m


def _cdiv(a: int, b: int) -> int:
    return (a + b - 1) // b


def _pick_cols(total: int):
    """Largest multiple of 128 (<= _LANE_COLS) dividing `total`, else None."""
    c = min(_LANE_COLS, (total // 128) * 128)
    while c >= 128:
        if total % c == 0:
            return c
        c -= 128
    return None


def _varied_range_kernel(s_ref, x_ref, o_ref):
    """s_ref: (1,) f32 in SMEM, precomputed scale = 0.8 + u/2.5.
       x_ref/o_ref: (tile_rows, cols) VMEM tiles; one VPU multiply."""
    o_ref[...] = (x_ref[...] * s_ref[0]).astype(o_ref.dtype)


def varied_range(x, key, *, donate_x: bool = False):
    """Equivalent of VariedRange.forward: x * (0.8 + U[0,1)/2.5)."""
    # glue: draw the single uniform scalar (torch.rand(1) analogue) and fold
    # the affine transform into one scalar so the kernel is a pure multiply.
    u = jax.random.uniform(key, (1,), dtype=jnp.float32)
    s = (0.8 + u / 2.5).astype(jnp.float32)          # scale in [0.8, 1.2)

    orig_shape = x.shape
    total = x.size
    # torch promotes integer tensors when multiplied by a float tensor;
    # floating dtypes stay narrow end-to-end (bandwidth).
    out_dtype = x.dtype if jnp.issubdtype(x.dtype, jnp.floating) else jnp.float32

    if total == 0:
        return jnp.zeros(orig_shape, out_dtype)

    # ---- lane-dense 2D layout (static Python) ------------------------------
    cols = _pick_cols(total)
    padded_total = total
    if cols is None:
        # rare ragged fallback: pad the flat array to a multiple of 128
        padded_total = _round_up(total, 128)
        cols = _pick_cols(padded_total)
    rows = padded_total // cols

    # ---- dtype-aware tile sizing (constant byte budget per buffer) ---------
    item = max(jnp.dtype(x.dtype).itemsize, jnp.dtype(out_dtype).itemsize)
    max_rows = max(8, (_BUF_BYTES // (cols * item)) // 8 * 8)
    total_bytes = rows * cols * item

    if rows <= 8 or total_bytes <= _SPLIT_MIN_BYTES:
        # small input: single block (block == full array is always legal),
        # or budget-sized blocks if rows happen to exceed the budget.
        tile_rows = rows if rows <= max_rows else max_rows
    else:
        # aim for an even grid (>= 2 steps) so both v7x TensorCores stream
        tile_rows = min(max_rows, _round_up(_cdiv(rows, 2), 8))
        g = _cdiv(rows, tile_rows)
        if g > 2 and g % 2 == 1:
            tr2 = _round_up(_cdiv(rows, g + 1), 8)
            if 8 <= tr2 <= max_rows and _cdiv(rows, tr2) % 2 == 0:
                tile_rows = tr2
    if tile_rows > rows:
        tile_rows = rows
    grid_n = _cdiv(rows, tile_rows)   # Pallas masks the final partial block

    x_flat = x.reshape(-1)
    if padded_total != total:
        x_flat = jnp.pad(x_flat, (0, padded_total - total))
    x2d = x_flat.reshape(rows, cols)

    aliases = {}
    if donate_x and padded_total == total and out_dtype == x.dtype:
        aliases = {1: 0}              # reuse x's HBM buffer for the output

    out2d = pl.pallas_call(
        _varied_range_kernel,
        out_shape=jax.ShapeDtypeStruct((rows, cols), out_dtype),
        grid=(grid_n,),
        in_specs=[
            pl.BlockSpec(memory_space=pltpu.MemorySpace.SMEM),   # scale s
            pl.BlockSpec((tile_rows, cols), lambda i: (i, 0)),   # x tile
        ],
        out_specs=pl.BlockSpec((tile_rows, cols), lambda i: (i, 0)),
        input_output_aliases=aliases,
        compiler_params=pltpu.CompilerParams(
            dimension_semantics=("parallel",),
            vmem_limit_bytes=_VMEM_LIMIT,
        ),
    )(s, x2d)

    out_flat = out2d.reshape(-1)
    if padded_total != total:
        out_flat = out_flat[:total]
    return out_flat.reshape(orig_shape)


if __name__ == "__main__":
    key = jax.random.PRNGKey(0)
    k_x, k_u = jax.random.split(key)

    # NCHW input, matching the PyTorch module's expected layout.
    x = jax.random.normal(k_x, (2, 4, 16, 16), dtype=jnp.float32)

    out = varied_range(x, k_u)
    jax.block_until_ready(out)

    # reference check (same uniform draw)
    u = jax.random.uniform(k_u, (1,), dtype=jnp.float32)
    ref = x * (0.8 + u / 2.5)
    assert out.shape == x.shape and out.dtype == x.dtype
    assert jnp.allclose(out, ref, atol=1e-6), "mismatch vs reference"

    print("KERNEL_OK")
</pallas_src>

<mosaic_0001>
module attributes {stable_mosaic.version = 11 : i64} {
  func.func @_varied_range_kernel(%arg0: i32, %arg1: memref<1xf32, #tpu.memory_space<smem>>, %arg2: memref<1x2048xf32, #tpu.memory_space<vmem>>, %arg3: memref<1x2048xf32, #tpu.memory_space<vmem>>) attributes {dimension_semantics = [#tpu.dimension_semantics<parallel>], iteration_bounds = array<i64: 1>, scalar_prefetch = 0 : i64, scratch_operands = 0 : i64, tpu.core_type = #tpu.core_type<tc>, window_params = [{transform_indices = @transform_0, window_bounds = array<i64: 1>}, {transform_indices = @transform_1, window_bounds = array<i64: 1, 2048>}, {transform_indices = @transform_2, window_bounds = array<i64: 1, 2048>}]} {
    %c0 = arith.constant 0 : index
    %c0_0 = arith.constant 0 : index
    %0 = vector.load %arg2[%c0, %c0_0] : memref<1x2048xf32, #tpu.memory_space<vmem>>, vector<1x2048xf32>
    %c0_1 = arith.constant 0 : index
    %1 = memref.load %arg1[%c0_1] : memref<1xf32, #tpu.memory_space<smem>>
    %2 = vector.broadcast %1 : f32 to vector<1x2048xf32>
    %3 = arith.mulf %0, %2 : vector<1x2048xf32>
    %c0_2 = arith.constant 0 : index
    %c0_3 = arith.constant 0 : index
    %4 = vector.load %arg3[%c0_2, %c0_3] : memref<1x2048xf32, #tpu.memory_space<vmem>>, vector<1x2048xf32>
    tpu.vector_store %arg3[%c0_2, %c0_3], %3 {strides = array<i32>} : memref<1x2048xf32, #tpu.memory_space<vmem>>, vector<1x2048xf32>,
    return
  }
  func.func @transform_0(%arg0: i32) -> i32 {
    %c0_i32 = arith.constant 0 : i32
    %c0_i32_0 = arith.constant 0 : i32
    return %c0_i32 : i32
  }
  func.func @transform_1(%arg0: i32) -> (i32, i32) {
    %c0_i32 = arith.constant 0 : i32
    %c0_i32_0 = arith.constant 0 : i32
    return %arg0, %c0_i32 : i32, i32
  }
  func.func @transform_2(%arg0: i32) -> (i32, i32) {
    %c0_i32 = arith.constant 0 : i32
    %c0_i32_0 = arith.constant 0 : i32
    return %arg0, %c0_i32 : i32, i32
  }
}

</mosaic_0001>

<llo_original>
// kernel: tpu_custom_call.1
$region0: #{tpu_custom_call.1}
  #allocation0 [shape = 'u32[]', space=smem, size = 0x4, offset = 0x4, fixed_abs, tag = 'smem constant byte address 0x4 - core index']
  #allocation1 [shape = 'u32[144,128]{1,0:T(1,128)}', space=vmem, size = 0x12000, scoped, tag = 'internal scratch']
  #allocation2 [shape = 'f32[1]{0:T(128)S(6)}', space=smem, size = 0x200, scoped, tag = 'scoped memory for tpu_custom_call.1']
  %s0 = inlined_call_operand.<no memory space> [shape: f32[1], index: 0, kind: input, shape index: {}]
  %s1 = inlined_call_operand.hbm [shape: f32[1,2048], index: 1, kind: input, shape index: {}]
  %s2 = inlined_call_operand.hbm [shape: f32[1,2048], index: 2, kind: output, shape index: {}]
  %s3 = sld [smem:[#allocation0]]
  $region22: #{tpu_custom_call.1} parent=0
    _
  %s5 = ssub.s32 1, %s3
  %s6 = scalar_select 0, %s5, %s3
  %7 = sst [smem:[#allocation2]] %s0
  $region1: #{tpu_custom_call.1} parent=0
    #allocation3 [shape = 'u8[8192]{0}', space=vmem, size = 0x2000, scoped, tag = 'input window, operand 1, single buffered']
    #allocation4 [shape = 's32[1]{0}', space=sflag, size = 0x4, scoped, tag = 'scoped memory for tpu_custom_call.1']
    #allocation5 [shape = 's32[1]{0}', space=sflag, size = 0x4, scoped, tag = 'scoped memory for tpu_custom_call.1']
    #allocation6 [shape = 'u8[8192]{0}', space=vmem, size = 0x2000, scoped, tag = 'output window, operand 0, single buffered']
    %8 = vsyncpa [#allocation4], 0
    %9 = vsyncpa [#allocation5], 0
    // Predicated region
    $region2: #{tpu_custom_call.1} parent=1 // pred_check
      _
    $region3: #{tpu_custom_call.1} parent=1 // pred_check_branch
      %11 = sbr.rel (0) target = $region5
    $region4: #{tpu_custom_call.1} parent=1 // pred_region
      _
    $region5: #{tpu_custom_call.1} parent=1 // pred_fallthru
      _
    // Predicated region
    $region6: #{tpu_custom_call.1} parent=1 // pred_check
      _
    $region7: #{tpu_custom_call.1} parent=1 // pred_check_branch
      %13 = sbr.rel (0) target = $region9
    $region8: #{tpu_custom_call.1} parent=1 // pred_region
      %s15 = ssub.s32 256, 256
      %16 = vsyncadd [#allocation4], %s15
      %s18 = sshll.u32 [#allocation3], 4
      %s19 = int_to_ptr.vmem [resolvable:$true] %s18
      %21 = dma.hbm_to_vmem [thread:$0]  %s1, 256, %s19, [#allocation4]
    $region9: #{tpu_custom_call.1} parent=1 // pred_fallthru
      _
    // Predicated region
    $region10: #{tpu_custom_call.1} parent=1 // pred_check
      _
    $region11: #{tpu_custom_call.1} parent=1 // pred_check_branch
      %23 = sbr.rel (0) target = $region13
    $region12: #{tpu_custom_call.1} parent=1 // pred_region
      %24 = dma.done [#allocation4], 256
    $region13: #{tpu_custom_call.1} parent=1 // pred_fallthru
      _
    %v25 = vld [vmem:[#allocation3] sm:$0xff]
    %v26 = vld [vmem:[#allocation3 + $0x8] sm:$0xff]
    %s27 = sld [smem:[#allocation2]]
    %v28 = vstv %s27
    %v29 = vmul.f32 %v25, %v28
    %v30 = vmul.f32 %v26, %v28
    %31 = vst [vmem:[#allocation6] sm:$0xff] %v29
    %32 = vst [vmem:[#allocation6 + $0x8] sm:$0xff] %v30
    // Predicated region
    $region14: #{tpu_custom_call.1} parent=1 // pred_check
      _
    $region15: #{tpu_custom_call.1} parent=1 // pred_check_branch
      %34 = sbr.rel (0) target = $region17
    $region16: #{tpu_custom_call.1} parent=1 // pred_region
      %s36 = ssub.s32 256, 256
      %37 = vsyncadd [#allocation5], %s36
      %s39 = sshll.u32 [#allocation6], 4
      %s40 = int_to_ptr.vmem [resolvable:$true] %s39
      %42 = dma.vmem_to_hbm [thread:$0]  %s40, 256, %s2, [#allocation5]
    $region17: #{tpu_custom_call.1} parent=1 // pred_fallthru
      _
    // Predicated region
    $region18: #{tpu_custom_call.1} parent=1 // pred_check
      _
    $region19: #{tpu_custom_call.1} parent=1 // pred_check_branch
      %44 = sbr.rel (0) target = $region21
    $region20: #{tpu_custom_call.1} parent=1 // pred_region
      %45 = dma.done [#allocation5], 256
    $region21: #{tpu_custom_call.1} parent=1 // pred_fallthru
      _
    %46 = vsyncpa [#allocation4], 1
    %47 = vsyncpa [#allocation5], 1

</llo_original>
